<compile_context>
chip_gen: v7x
topology: tpu7x:2x2x1
jax: 0.10.0
libtpu: 0.0.40
codegen_flags: <defaults>
</compile_context>

<pallas_src>
import functools

import jax
import jax.numpy as jnp
from jax import lax
from jax.experimental import pallas as pl
from jax.experimental.pallas import tpu as pltpu


# ---------------------------------------------------------------------------
# Hardware / sizing helpers
# ---------------------------------------------------------------------------

def _vmem_capacity_bytes():
    try:
        return int(pltpu.get_tpu_info().vmem_capacity_bytes)
    except Exception:
        return 64 << 20  # conservative fallback (v7x per-TensorCore VMEM)


def _largest_divisor_leq(n, cap):
    cap = max(1, min(int(n), int(cap)))
    for d in range(cap, 0, -1):
        if n % d == 0:
            return d
    return 1


def _choose_tiles(B, C, hw_p, itemsize, block_budget):
    """Pick (tile_b, tile_n): lane-dense x blocks of roughly block_budget bytes."""
    lane_budget = max(128, (block_budget // (C * itemsize)) // 128 * 128)
    k = hw_p // 128
    tile_n = 128 * _largest_divisor_leq(k, lane_budget // 128)
    tile_b = 1
    if tile_n == hw_p:
        max_tb = max(1, block_budget // (C * hw_p * itemsize))
        tile_b = _largest_divisor_leq(B, min(max_tb, 32))  # cap unroll length
    return tile_b, tile_n


# ---------------------------------------------------------------------------
# Kernels
# ---------------------------------------------------------------------------

def _stats_kernel(x_ref, psum_ref, psumsq_ref, acc_s, acc_q):
    """Per batch-group partial per-channel sum / sum-of-squares.

    Grid = (G, T): G batch-groups ("parallel", megacore-shardable), T hw-tiles
    ("arbitrary", sequential accumulation). Hot loop is VPU-only elementwise
    adds into (C, tile_n) f32 scratch; a single XLU lane-reduce runs at the
    last tile of each group.
    """
    t = pl.program_id(1)

    @pl.when(t == 0)
    def _init():
        acc_s[...] = jnp.zeros_like(acc_s)
        acc_q[...] = jnp.zeros_like(acc_q)

    for b in range(x_ref.shape[0]):            # static, tile_b <= 32
        xb = x_ref[b].astype(jnp.float32)      # (C, tile_n)
        acc_s[...] += xb
        acc_q[...] += xb * xb

    @pl.when(t == pl.num_programs(1) - 1)
    def _finalize():
        psum_ref[0] = jnp.sum(acc_s[...], axis=1, keepdims=True)
        psumsq_ref[0] = jnp.sum(acc_q[...], axis=1, keepdims=True)


def _normalize_kernel(stats_ref, x_ref, y_ref):
    """y = (x - mean) * inv_std, one lane-dense tile per grid step."""
    mean = stats_ref[:, 0:1]        # (C, 1)
    inv_std = stats_ref[:, 1:2]     # (C, 1)
    for b in range(x_ref.shape[0]):
        xb = x_ref[b].astype(jnp.float32)
        y_ref[b] = ((xb - mean) * inv_std).astype(y_ref.dtype)


def _fused_kernel(x_hbm, y_hbm, mean_ref, std_ref, ld_ref, xbuf, *, n_total):
    """Single-pass path: x resident in VMEM, normalized in place, 2*|x| HBM traffic."""
    pltpu.sync_copy(x_hbm, xbuf)                     # HBM -> VMEM
    bb, c, _ = xbuf.shape

    def stat_body(b, carry):
        s, q = carry
        xb = xbuf[b].astype(jnp.float32)             # (C, HWp)
        s = s + jnp.sum(xb, axis=1, keepdims=True)
        q = q + jnp.sum(xb * xb, axis=1, keepdims=True)
        return s, q

    zero = jnp.zeros((c, 1), jnp.float32)
    s, q = lax.fori_loop(0, bb, stat_body, (zero, zero))

    n = jnp.asarray(n_total, jnp.float32)
    mean = s / n
    # Unbiased variance (ddof=1), matching torch.std default. Zero-padding on the
    # lane axis contributes nothing to s / q; n_total is the true element count.
    var = jnp.maximum((q - n * mean * mean) / (n - 1.0), 0.0)
    std = jnp.sqrt(var)                               # no eps: match PyTorch
    inv_std = 1.0 / std
    mean_ref[...] = mean
    std_ref[...] = std
    ld_ref[...] = jnp.sum(jnp.log(std)).reshape(1, 1)

    def norm_body(b, _):
        xb = xbuf[b].astype(jnp.float32)
        xbuf[b] = ((xb - mean) * inv_std).astype(xbuf.dtype)
        return 0

    lax.fori_loop(0, bb, norm_body, 0)
    pltpu.sync_copy(xbuf, y_hbm)                      # VMEM -> HBM


# ---------------------------------------------------------------------------
# Wrapper
# ---------------------------------------------------------------------------

def actnorm_forward(x, *, tile_n=None, tile_b=None, force_two_pass=False):
    """x: (B, C, H, W). Returns (y, log_det, scale, bias);
    y: (B, C, H, W), log_det: scalar, scale/bias: (1, C, 1, 1)."""
    B, C, H, W = x.shape
    HW = H * W
    N = B * HW
    itemsize = jnp.dtype(x.dtype).itemsize

    # Lane-dense padding of the spatial axis (zeros are harmless for sum/sumsq).
    hw_p = ((HW + 127) // 128) * 128
    x3 = x.reshape(B, C, HW)                 # free reshape, no data movement
    if hw_p != HW:
        # TODO(synk): masked in-kernel stores would avoid this extra HBM copy of x.
        x3 = jnp.pad(x3, ((0, 0), (0, 0), (0, hw_p - HW)))

    vmem_cap = _vmem_capacity_bytes()
    big_part = vmem_cap >= (128 << 20)       # v5e / v6e (128 MiB) vs v7x (64 MiB)
    x_bytes = B * C * hw_p * itemsize
    np_padded = B * hw_p

    # ---------------- fused single-pass path (x resident in VMEM) -------------
    fused_bytes = x_bytes + 3 * C * hw_p * 4 + (1 << 20)    # xbuf + per-row f32 temps
    if not force_two_pass and fused_bytes <= vmem_cap // 2:
        y3, mean, std, ld = pl.pallas_call(
            functools.partial(_fused_kernel, n_total=N),
            out_shape=(
                jax.ShapeDtypeStruct((B, C, hw_p), x.dtype),   # y (in-place buffer)
                jax.ShapeDtypeStruct((C, 1), jnp.float32),     # mean (bias)
                jax.ShapeDtypeStruct((C, 1), jnp.float32),     # std  (scale)
                jax.ShapeDtypeStruct((1, 1), jnp.float32),     # log_det
            ),
            in_specs=[pl.BlockSpec(memory_space=pl.ANY)],
            out_specs=(
                pl.BlockSpec(memory_space=pl.ANY),
                pl.BlockSpec(memory_space=pltpu.MemorySpace.VMEM),
                pl.BlockSpec(memory_space=pltpu.MemorySpace.VMEM),
                pl.BlockSpec(memory_space=pltpu.MemorySpace.VMEM),
            ),
            scratch_shapes=[pltpu.VMEM((B, C, hw_p), x.dtype)],
            compiler_params=pltpu.CompilerParams(
                vmem_limit_bytes=(vmem_cap * 3) // 4),
            cost_estimate=pl.CostEstimate(
                flops=5 * C * np_padded, transcendentals=3 * C,
                bytes_accessed=2 * x_bytes),
        )(x3)
        log_det = ld[0, 0]

    # ---------------- tiled two-pass path -------------------------------------
    else:
        if big_part:
            vmem_limit = 96 << 20
            live_budget = 48 << 20
        else:
            vmem_limit = 32 << 20      # v7x default scoped VMEM
            live_budget = 24 << 20
        # Per-x-block budget accounting for pipeline copies + f32 scratch/temps.
        block_budget = max(512 << 10,
                           live_budget * itemsize // (2 * itemsize + 16))

        if tile_b is None or tile_n is None:
            tb_auto, tn_auto = _choose_tiles(B, C, hw_p, itemsize, block_budget)
            tile_b = tb_auto if tile_b is None else tile_b
            tile_n = tn_auto if tile_n is None else tile_n
        assert hw_p % tile_n == 0 and tile_n % 128 == 0
        assert B % tile_b == 0
        G = B // tile_b
        T = hw_p // tile_n

        x_spec = pl.BlockSpec((tile_b, C, tile_n), lambda g, t: (g, 0, t))
        part_spec = pl.BlockSpec((1, C, 1), lambda g, t: (g, 0, 0))

        # ---- pass 1: per-group partial per-channel stats ----
        psum, psumsq = pl.pallas_call(
            _stats_kernel,
            out_shape=(
                jax.ShapeDtypeStruct((G, C, 1), jnp.float32),
                jax.ShapeDtypeStruct((G, C, 1), jnp.float32),
            ),
            grid=(G, T),
            in_specs=[x_spec],
            out_specs=(part_spec, part_spec),
            scratch_shapes=[
                pltpu.VMEM((C, tile_n), jnp.float32),   # running sum
                pltpu.VMEM((C, tile_n), jnp.float32),   # running sum of squares
            ],
            compiler_params=pltpu.CompilerParams(
                dimension_semantics=("parallel", "arbitrary"),
                vmem_limit_bytes=vmem_limit),
            cost_estimate=pl.CostEstimate(
                flops=3 * C * np_padded, transcendentals=0,
                bytes_accessed=x_bytes + 2 * G * C * 4),
        )(x3)

        # ---- finalize stats on tiny (G, C, 1) arrays in the wrapper ----
        s = jnp.sum(psum, axis=0)        # (C, 1)
        q = jnp.sum(psumsq, axis=0)      # (C, 1)
        n = jnp.asarray(N, jnp.float32)
        mean = s / n
        var = jnp.maximum((q - n * mean * mean) / (n - 1.0), 0.0)
        std = jnp.sqrt(var)              # no eps: match PyTorch
        inv_std = 1.0 / std
        log_det = jnp.sum(jnp.log(std))
        stats = jnp.concatenate([mean, inv_std], axis=1)   # (C, 2)

        # ---- pass 2: normalize (fully parallel, lane-dense stores) ----
        y3 = pl.pallas_call(
            _normalize_kernel,
            out_shape=jax.ShapeDtypeStruct((B, C, hw_p), x.dtype),
            grid=(G, T),
            in_specs=[pl.BlockSpec((C, 2), lambda g, t: (0, 0)), x_spec],
            out_specs=x_spec,
            compiler_params=pltpu.CompilerParams(
                dimension_semantics=("parallel", "parallel"),
                vmem_limit_bytes=vmem_limit),
            cost_estimate=pl.CostEstimate(
                flops=2 * C * np_padded, transcendentals=0,
                bytes_accessed=2 * x_bytes),
        )(stats, x3)

    if hw_p != HW:
        y3 = y3[:, :, :HW]
    y = y3.reshape(B, C, H, W)
    scale = std.reshape(1, C, 1, 1)
    bias = mean.reshape(1, C, 1, 1)
    return y, log_det, scale, bias


# ---------------------------------------------------------------------------
# Self-test
# ---------------------------------------------------------------------------

if __name__ == "__main__":
    key = jax.random.PRNGKey(0)

    def reference(x):
        # Pure-JAX reference (matches the PyTorch forward on its first call).
        mean = jnp.mean(x, axis=(0, 2, 3), keepdims=True)
        n = x.shape[0] * x.shape[2] * x.shape[3]
        var = jnp.sum((x - mean) ** 2, axis=(0, 2, 3), keepdims=True) / (n - 1)
        std = jnp.sqrt(var)
        return (x - mean) / std, jnp.sum(jnp.log(std)), std, mean

    def check(x, **kw):
        y, ld, sc, bi = actnorm_forward(x, **kw)
        jax.block_until_ready((y, ld, sc, bi))
        y_r, ld_r, sc_r, bi_r = reference(x)
        assert jnp.allclose(y, y_r, atol=1e-4, rtol=1e-4), "y mismatch"
        assert jnp.allclose(sc, sc_r, atol=1e-4, rtol=1e-4), "scale mismatch"
        assert jnp.allclose(bi, bi_r, atol=1e-4, rtol=1e-4), "bias mismatch"
        assert jnp.allclose(ld, ld_r, atol=1e-4, rtol=1e-4), "log_det mismatch"

    k0, k1, k2 = jax.random.split(key, 3)

    # Shape implied by the module spec: fused VMEM-resident path.
    x0 = jax.random.normal(k0, (2, 4, 16, 16), jnp.float32) * 2.0 + 0.5
    check(x0)

    # H*W not a multiple of 128 -> lane-padding path.
    x1 = jax.random.normal(k1, (2, 4, 7, 7), jnp.float32) * 0.7 - 1.3
    check(x1)

    # Tiled two-pass path: multi-tile sequential accumulation + parallel batch groups.
    x2 = jax.random.normal(k2, (4, 8, 32, 32), jnp.float32) * 1.5 + 0.25
    check(x2, force_two_pass=True, tile_b=2, tile_n=256)

    print("KERNEL_OK")
</pallas_src>

<mosaic_0001>
module attributes {stable_mosaic.version = 11 : i64} {
  func.func @_fused_kernel(%arg0: memref<2x4x256xf32, #tpu.memory_space<any>>, %arg1: memref<2x4x256xf32, #tpu.memory_space<any>>, %arg2: memref<4x1xf32, #tpu.memory_space<vmem>>, %arg3: memref<4x1xf32, #tpu.memory_space<vmem>>, %arg4: memref<1x1xf32, #tpu.memory_space<vmem>>, %arg5: memref<2x4x256xf32, #tpu.memory_space<vmem>>) attributes {dimension_semantics = [], scalar_prefetch = 0 : i64, scratch_operands = 1 : i64, tpu.core_type = #tpu.core_type<tc>} {
    "tpu.region"() ({
      %27 = tpu.sem_alloc : memref<!tpu.dma_semaphore, #tpu.memory_space<semaphore_mem>>
      tpu.enqueue_dma source(%arg0 : memref<2x4x256xf32, #tpu.memory_space<any>>) target(%arg5 : memref<2x4x256xf32, #tpu.memory_space<vmem>>) target_semaphore(%27 : memref<!tpu.dma_semaphore, #tpu.memory_space<semaphore_mem>>)
      tpu.wait_dma2 semaphore(%27 : memref<!tpu.dma_semaphore, #tpu.memory_space<semaphore_mem>>) src(%arg0 : memref<2x4x256xf32, #tpu.memory_space<any>>) dst(%arg5 : memref<2x4x256xf32, #tpu.memory_space<vmem>>)
      tpu.yield
    }) : () -> ()
    %cst = arith.constant 0.000000e+00 : f32
    %0 = vector.broadcast %cst : f32 to vector<4x1xf32>
    %c0_i32 = arith.constant 0 : i32
    %c2_i32 = arith.constant 2 : i32
    %1 = arith.addi %c0_i32, %c2_i32 : i32
    %c1_i32 = arith.constant 1 : i32
    %2:2 = scf.for %arg6 = %c0_i32 to %1 step %c1_i32 iter_args(%arg7 = %0, %arg8 = %0) -> (vector<4x1xf32>, vector<4x1xf32>)  : i32 {
      %27 = arith.index_cast %arg6 : i32 to index
      %c0_17 = arith.constant 0 : index
      %c0_18 = arith.constant 0 : index
      %28 = vector.load %arg5[%27, %c0_17, %c0_18] : memref<2x4x256xf32, #tpu.memory_space<vmem>>, vector<1x4x256xf32>
      %29 = vector.shape_cast %28 : vector<1x4x256xf32> to vector<4x256xf32>
      %cst_19 = arith.constant dense<0.000000e+00> : vector<4xf32>
      %30 = vector.multi_reduction <add>, %29, %cst_19 [1] : vector<4x256xf32> to vector<4xf32>
      %31 = vector.shape_cast %30 : vector<4xf32> to vector<4x1xf32>
      %32 = arith.addf %arg7, %31 : vector<4x1xf32>
      %33 = arith.mulf %29, %29 : vector<4x256xf32>
      %cst_20 = arith.constant dense<0.000000e+00> : vector<4xf32>
      %34 = vector.multi_reduction <add>, %33, %cst_20 [1] : vector<4x256xf32> to vector<4xf32>
      %35 = vector.shape_cast %34 : vector<4xf32> to vector<4x1xf32>
      %36 = arith.addf %arg8, %35 : vector<4x1xf32>
      scf.yield %32, %36 : vector<4x1xf32>, vector<4x1xf32>
    }
    %c2_i32_0 = arith.constant 2 : i32
    %cst_1 = arith.constant 5.120000e+02 : f32
    %3 = vector.broadcast %cst_1 : f32 to vector<4x1xf32>
    %4 = arith.divf %2#0, %3 : vector<4x1xf32>
    %cst_2 = arith.constant 5.120000e+02 : f32
    %5 = vector.broadcast %cst_2 : f32 to vector<4x1xf32>
    %6 = arith.mulf %5, %4 : vector<4x1xf32>
    %7 = arith.mulf %6, %4 : vector<4x1xf32>
    %8 = arith.subf %2#1, %7 : vector<4x1xf32>
    %cst_3 = arith.constant 5.120000e+02 : f32
    %cst_4 = arith.constant 1.000000e+00 : f32
    %9 = arith.subf %cst_3, %cst_4 : f32
    %10 = vector.broadcast %9 : f32 to vector<4x1xf32>
    %11 = arith.divf %8, %10 : vector<4x1xf32>
    %cst_5 = arith.constant 0.000000e+00 : f32
    %12 = vector.broadcast %cst_5 : f32 to vector<4x1xf32>
    %13 = arith.maximumf %11, %12 : vector<4x1xf32>
    %14 = math.sqrt %13 : vector<4x1xf32>
    %cst_6 = arith.constant 1.000000e+00 : f32
    %15 = vector.broadcast %cst_6 : f32 to vector<4x1xf32>
    %16 = arith.divf %15, %14 : vector<4x1xf32>
    %c0 = arith.constant 0 : index
    %c0_7 = arith.constant 0 : index
    %17 = vector.load %arg2[%c0, %c0_7] : memref<4x1xf32, #tpu.memory_space<vmem>>, vector<4x1xf32>
    tpu.vector_store %arg2[%c0, %c0_7], %4 {strides = array<i32>} : memref<4x1xf32, #tpu.memory_space<vmem>>, vector<4x1xf32>,
    %c0_8 = arith.constant 0 : index
    %c0_9 = arith.constant 0 : index
    %18 = vector.load %arg3[%c0_8, %c0_9] : memref<4x1xf32, #tpu.memory_space<vmem>>, vector<4x1xf32>
    tpu.vector_store %arg3[%c0_8, %c0_9], %14 {strides = array<i32>} : memref<4x1xf32, #tpu.memory_space<vmem>>, vector<4x1xf32>,
    %19 = math.log %14 : vector<4x1xf32>
    %20 = vector.shape_cast %19 : vector<4x1xf32> to vector<1x4x1xf32>
    %cst_10 = arith.constant dense<0.000000e+00> : vector<1xf32>
    %21 = vector.multi_reduction <add>, %20, %cst_10 [1, 2] : vector<1x4x1xf32> to vector<1xf32>
    %22 = vector.shape_cast %21 : vector<1xf32> to vector<1x1x1xf32>
    %23 = vector.extract %22[0, 0, 0] : f32 from vector<1x1x1xf32>
    %24 = vector.broadcast %23 : f32 to vector<1x1xf32>
    %c0_11 = arith.constant 0 : index
    %c0_12 = arith.constant 0 : index
    %25 = vector.load %arg4[%c0_11, %c0_12] : memref<1x1xf32, #tpu.memory_space<vmem>>, vector<1x1xf32>
    tpu.vector_store %arg4[%c0_11, %c0_12], %24 {strides = array<i32>} : memref<1x1xf32, #tpu.memory_space<vmem>>, vector<1x1xf32>,
    %c0_i32_13 = arith.constant 0 : i32
    %c2_i32_14 = arith.constant 2 : i32
    %26 = arith.addi %c0_i32_13, %c2_i32_14 : i32
    %c1_i32_15 = arith.constant 1 : i32
    scf.for %arg6 = %c0_i32_13 to %26 step %c1_i32_15  : i32 {
      %27 = arith.index_cast %arg6 : i32 to index
      %c0_17 = arith.constant 0 : index
      %c0_18 = arith.constant 0 : index
      %28 = vector.load %arg5[%27, %c0_17, %c0_18] : memref<2x4x256xf32, #tpu.memory_space<vmem>>, vector<1x4x256xf32>
      %29 = vector.shape_cast %28 : vector<1x4x256xf32> to vector<4x256xf32>
      %30 = vector.broadcast %4 : vector<4x1xf32> to vector<4x256xf32>
      %31 = arith.subf %29, %30 : vector<4x256xf32>
      %32 = vector.broadcast %16 : vector<4x1xf32> to vector<4x256xf32>
      %33 = arith.mulf %31, %32 : vector<4x256xf32>
      %34 = arith.index_cast %arg6 : i32 to index
      %c0_19 = arith.constant 0 : index
      %c0_20 = arith.constant 0 : index
      %35 = vector.load %arg5[%34, %c0_19, %c0_20] : memref<2x4x256xf32, #tpu.memory_space<vmem>>, vector<1x4x256xf32>
      %36 = vector.shape_cast %35 : vector<1x4x256xf32> to vector<4x256xf32>
      %37 = vector.shape_cast %33 : vector<4x256xf32> to vector<1x4x256xf32>
      tpu.vector_store %arg5[%34, %c0_19, %c0_20], %37 {strides = array<i32>} : memref<2x4x256xf32, #tpu.memory_space<vmem>>, vector<1x4x256xf32>,
    }
    %c2_i32_16 = arith.constant 2 : i32
    "tpu.region"() ({
      %27 = tpu.sem_alloc : memref<!tpu.dma_semaphore, #tpu.memory_space<semaphore_mem>>
      tpu.enqueue_dma source(%arg5 : memref<2x4x256xf32, #tpu.memory_space<vmem>>) target(%arg1 : memref<2x4x256xf32, #tpu.memory_space<any>>) target_semaphore(%27 : memref<!tpu.dma_semaphore, #tpu.memory_space<semaphore_mem>>)
      tpu.wait_dma2 semaphore(%27 : memref<!tpu.dma_semaphore, #tpu.memory_space<semaphore_mem>>) src(%arg5 : memref<2x4x256xf32, #tpu.memory_space<vmem>>) dst(%arg1 : memref<2x4x256xf32, #tpu.memory_space<any>>)
      tpu.yield
    }) : () -> ()
    return
  }
}

</mosaic_0001>

<llo_original>
// kernel: tpu_custom_call.1
$region0: #{tpu_custom_call.1}
  #allocation0 [shape = 'u32[]', space=smem, size = 0x4, offset = 0x4, fixed_abs, tag = 'smem constant byte address 0x4 - core index']
  #allocation1 [shape = 'u32[144,128]{1,0:T(1,128)}', space=vmem, size = 0x12000, scoped, tag = 'internal scratch']
  #allocation2 [shape = 'f32[2,4,256]{2,1,0:T(4,128)}', space=vmem, size = 0x2000, scoped, tag = 'scratch operand']
  #allocation6 [shape = 's32[]', space=sflag, size = 0x4, offset = 0, fixed_abs, tag = 'sflag constant byte address 0x0 - dummy sync flag']
  #allocation7 [shape = 's32[]', space=sflag, size = 0x4, offset = 0, fixed_abs, tag = 'sflag constant byte address 0x0 - dummy sync flag']
  #allocation8 [shape = 'u32[]', space=smem, size = 0x4, offset = 0x44, fixed_abs, tag = 'smem constant byte address 0x44 - assertion arg 0']
  #allocation9 [shape = 'u32[]', space=smem, size = 0x4, offset = 0x48, fixed_abs, tag = 'smem constant byte address 0x48 - assertion arg 1']
  #allocation11 [shape = 's32[]', space=sflag, size = 0x4, offset = 0, fixed_abs, tag = 'sflag constant byte address 0x0 - dummy sync flag']
  #allocation12 [shape = 's32[]', space=sflag, size = 0x4, offset = 0, fixed_abs, tag = 'sflag constant byte address 0x0 - dummy sync flag']
  %s0 = inlined_call_operand.hbm [shape: f32[2,4,256], index: 0, kind: input, shape index: {}]
  %s1 = inlined_call_operand.hbm [shape: f32[2,4,256], index: 1, kind: output, shape index: {0}]
  %s2 = inlined_call_operand.vmem [shape: f32[4,1], index: 2, kind: output, shape index: {1}]
  %s3 = inlined_call_operand.vmem [shape: f32[4,1], index: 3, kind: output, shape index: {2}]
  %s4 = inlined_call_operand.hbm [shape: f32[1,1], index: 4, kind: output, shape index: {3}]
  %5 = xla_tuple %s1, %s2, %s3, %s4
  %s6 = sld [smem:[#allocation0]]
  $region50: #{tpu_custom_call.1} parent=0
    _
  %s8 = ssub.s32 1, %s6
  %s9 = scalar_select 0, %s8, %s6
  $region1: #{tpu_custom_call.1} parent=0
    #allocation3 [shape = 'u8[512]{0}', space=vmem, size = 0x400, scoped, tag = 'output window, operand 3, single buffered']
    #allocation4 [shape = 's32[1]{0}', space=sflag, size = 0x4, scoped, tag = 'scoped memory for tpu_custom_call.1']
    %10 = vsyncpa [#allocation4], 0
    $region2: #{tpu_custom_call.1} parent=1
      #allocation5 [shape = 's32[1]{0}', space=sflag, size = 0x4, scoped, tag = 'scoped memory for tpu_custom_call.1']
      // Predicated region
      $region3: #{tpu_custom_call.1} parent=2 // pred_check
        _
      $region4: #{tpu_custom_call.1} parent=2 // pred_check_branch
        %12 = sbr.rel target = $region6
      $region5: #{tpu_custom_call.1} parent=2 // pred_region
        %13 = sst [smem:[#allocation8]] [#allocation7]
        %14 = sst [smem:[#allocation9]] [#allocation6]
      $region6: #{tpu_custom_call.1} parent=2 // pred_fallthru
        _
      %16 = shalt.err (0)
      %s18 = sshll.u32 [#allocation2], 4
      %s19 = int_to_ptr.vmem [resolvable:$true] %s18
      %21 = dma.hbm_to_vmem [thread:$0]  %s0, 256, %s19, [#allocation5]
      %s22 = smul.u32 4, 2
      %s23 = smul.u32 %s22, 1
      %s24 = smul.u32 %s23, 2
      %s25 = sshll.u32 %s24, 4
      %26 = dma.done [#allocation5], %s25
    loop: start=0, step=1, limit=2
    $region7: #{tpu_custom_call.1} parent=1 // loop_pre_header
      _
    $region8: #{tpu_custom_call.1} parent=1 // loop_header
      %s28 = sphi 0, %s32
      %p29 = scmp.ge.s32.totalorder %s28, 2
      %v33 = vphi 0.0, %v48
      %v34 = vphi 0.0, %v58
    $region9: #{tpu_custom_call.1} parent=1 // loop_header_branch
      %31 = sbr.rel (%p29) target = $region13
    $region10: #{tpu_custom_call.1} parent=1 // loop_body
      %s35 = smul.u32 %s28, 2
      %s36 = smul.addr %s35, 4
      %s37 = scalar_lea.vmem [#allocation2], %s36
      %v38 = vld [vmem:[%s37] sm:$0xff]
      %v40 = vcombine.high %v38, %v38
      %vm42 = vcmask 1043456
      %v43 = vsel %vm42, %v38, 0.0
      %v44 = vsel %vm42, %v40, 0.0
      %v45 = vadd.f32 %v43, %v44
      %46 = vadd.xlane.f32.xlu0 %v45
      %v47 = vpop.xlane.xlu0 %46
      %v48 = vadd.f32 %v33, %v47
      %v49 = vmul.f32 %v38, %v38
      %v51 = vcombine.high %v49, %v49
      %v53 = vsel %vm42, %v49, 0.0
      %v54 = vsel %vm42, %v51, 0.0
      %v55 = vadd.f32 %v53, %v54
      %56 = vadd.xlane.f32.xlu0 %v55
      %v57 = vpop.xlane.xlu0 %56
      %v58 = vadd.f32 %v34, %v57
    $region11: #{tpu_custom_call.1} parent=1 // loop_footer
      %s32 = sadd.s32 1, %s28
    $region12: #{tpu_custom_call.1} parent=1 // loop_footer_branch
      %27 = sbr.rel target = $region8
    $region13: #{tpu_custom_call.1} parent=1 // loop_exit
      _
    %v59 = vrcp.pop 512.0
    %v60 = vmul.f32 %v33, %v59
    %v61 = vmul.f32 %v60, 512.0
    %v62 = vmul.f32 %v61, %v60
    %v63 = vsub.f32 %v34, %v62
    %v64 = vrcp.pop 511.0
    %v65 = vmul.f32 %v63, %v64
    %v66 = vmax.f32 %v65, 0.0
    %v67 = vrsqrt.pop %v66
    %v68 = vmul.f32 %v66, %v67
    %vm69 = vcmp.eq.f32.partialorder %v66, inf
    %v70 = vsel %vm69, %v66, %v68
    %vm71 = vcmp.eq.f32.partialorder %v66, 0.0
    %v72 = vand.u32 %v66, 2147483648
    %v73 = vsel %vm71, %v72, %v70
    %v74 = vrcp.pop %v73
    %v75 = vmul.f32 1.0, %v74
    %vm76 = vcmask 3072
    %77 = vst.msk [vmem:[%s2] sm:$0xf] %vm76, %v60
    %78 = vst.msk [vmem:[%s3] sm:$0xf] %vm76, %v73
    %v79 = vlog2.pop %v73
    %v80 = vmul.f32 %v79, 0.6931472
    %v81 = vsel %vm76, %v80, 0.0
    %82 = vadd.xlane.f32.xlu0 %v81
    %v83 = vpop.xlane.xlu0 %82
    %v84 = vrot.slane %v83, 4
    %v85 = vadd.f32 %v83, %v84
    %v86 = vrot.slane %v85, 2
    %v87 = vadd.f32 %v85, %v86
    %v88 = vrot.slane %v87, 1
    %v89 = vadd.f32 %v87, %v88
    %s90 = vtos %v89
    %v91 = vstv %s90
    %vm92 = vcmask 0
    %93 = vst.msk [vmem:[#allocation3] sm:$0x1] %vm92, %v91
    loop: start=0, step=1, limit=2
    $region14: #{tpu_custom_call.1} parent=1 // loop_pre_header
      _
    $region15: #{tpu_custom_call.1} parent=1 // loop_header
      %s95 = sphi 0, %s99
      %p96 = scmp.ge.s32.totalorder %s95, 2
    $region16: #{tpu_custom_call.1} parent=1 // loop_header_branch
      %98 = sbr.rel (%p96) target = $region20
    $region17: #{tpu_custom_call.1} parent=1 // loop_body
      %s100 = smul.u32 %s95, 2
      %s101 = smul.addr %s100, 4
      %s102 = scalar_lea.vmem [#allocation2], %s101
      %v103 = vld [vmem:[%s102] sm:$0xff]
      %v106 = vunpack.c.l.s4 839922192
      %v107 = vunpack.c.0.s8 %v106
      %v108 = vlaneseq
      %v109 = vshrl.u32 %v108, 7
      %v110 = vsub.s32 %v107, %v109
      %v111 = vrot.slane %v60, %v110
      %v113 = vsub.f32 %v103, %v111
      %v116 = vunpack.c.l.s4 839922192
      %v117 = vunpack.c.0.s8 %v116
      %v118 = vlaneseq
      %v119 = vshrl.u32 %v118, 7
      %v120 = vsub.s32 %v117, %v119
      %v121 = vrot.slane %v75, %v120
      %v123 = vmul.f32 %v113, %v121
      %124 = vst [vmem:[%s102] sm:$0xff] %v123
    $region18: #{tpu_custom_call.1} parent=1 // loop_footer
      %s99 = sadd.s32 1, %s95
    $region19: #{tpu_custom_call.1} parent=1 // loop_footer_branch
      %94 = sbr.rel target = $region15
    $region20: #{tpu_custom_call.1} parent=1 // loop_exit
      _
    $region21: #{tpu_custom_call.1} parent=1
      #allocation10 [shape = 's32[1]{0}', space=sflag, size = 0x4, scoped, tag = 'scoped memory for tpu_custom_call.1']
      // Predicated region
      $region22: #{tpu_custom_call.1} parent=21 // pred_check
        _
      $region23: #{tpu_custom_call.1} parent=21 // pred_check_branch
        %126 = sbr.rel target = $region25
      $region24: #{tpu_custom_call.1} parent=21 // pred_region
        %127 = sst [smem:[#allocation8]] [#allocation12]
        %128 = sst [smem:[#allocation9]] [#allocation11]
      $region25: #{tpu_custom_call.1} parent=21 // pred_fallthru
        _
      %130 = shalt.err (0)
      %s132 = sshll.u32 [#allocation2], 4
      %s133 = int_to_ptr.vmem [resolvable:$true] %s132
      %135 = dma.vmem_to_hbm [thread:$0]  %s133, 256, %s1, [#allocation10]
      %s136 = smul.u32 4, 2
      %s137 = smul.u32 %s136, 1
      %s138 = smul.u32 %s137, 2
      %s139 = sshll.u32 %s138, 4
      %140 = dma.done [#allocation10], %s139
    // Predicated region
    $region26: #{tpu_custom_call.1} parent=1 // pred_check
      _
    $region27: #{tpu_custom_call.1} parent=1 // pred_check_branch
      %142 = sbr.rel (0) target = $region29
    $region28: #{tpu_custom_call.1} parent=1 // pred_region
      _
    $region29: #{tpu_custom_call.1} parent=1 // pred_fallthru
      _
    // Predicated region
    $region30: #{tpu_custom_call.1} parent=1 // pred_check
      _
    $region31: #{tpu_custom_call.1} parent=1 // pred_check_branch
      %144 = sbr.rel (0) target = $region33
    $region32: #{tpu_custom_call.1} parent=1 // pred_region
      _
    $region33: #{tpu_custom_call.1} parent=1 // pred_fallthru
      _
    // Predicated region
    $region34: #{tpu_custom_call.1} parent=1 // pred_check
      _
    $region35: #{tpu_custom_call.1} parent=1 // pred_check_branch
      %146 = sbr.rel (0) target = $region37
    $region36: #{tpu_custom_call.1} parent=1 // pred_region
      %s148 = ssub.s32 16, 16
      %149 = vsyncadd [#allocation4], %s148
      %s151 = sshll.u32 [#allocation3], 4
      %s152 = int_to_ptr.vmem [resolvable:$true] %s151
      %154 = dma.vmem_to_hbm [thread:$0]  %s152, 16, %s4, [#allocation4]
    $region37: #{tpu_custom_call.1} parent=1 // pred_fallthru
      _
    // Predicated region
    $region38: #{tpu_custom_call.1} parent=1 // pred_check
      _
    $region39: #{tpu_custom_call.1} parent=1 // pred_check_branch
      %156 = sbr.rel (0) target = $region41
    $region40: #{tpu_custom_call.1} parent=1 // pred_region
      _
    $region41: #{tpu_custom_call.1} parent=1 // pred_fallthru
      _
    // Predicated region
    $region42: #{tpu_custom_call.1} parent=1 // pred_check
      _
    $region43: #{tpu_custom_call.1} parent=1 // pred_check_branch
      %158 = sbr.rel (0) target = $region45
    $region44: #{tpu_custom_call.1} parent=1 // pred_region
      _
    $region45: #{tpu_custom_call.1} parent=1 // pred_fallthru
      _
    // Predicated region
    $region46: #{tpu_custom_call.1} parent=1 // pred_check
      _
    $region47: #{tpu_custom_call.1} parent=1 // pred_check_branch
      %160 = sbr.rel (0) target = $region49
    $region48: #{tpu_custom_call.1} parent=1 // pred_region
      %161 = dma.done [#allocation4], 16
    $region49: #{tpu_custom_call.1} parent=1 // pred_fallthru
      _
    %162 = vsyncpa [#allocation4], 1

</llo_original>
